<compile_context>
chip_gen: v6e
topology: v6e:2x2x1
jax: 0.10.0
libtpu: 0.0.40
codegen_flags: <defaults>
</compile_context>

<pallas_src>
import jax
import jax.numpy as jnp
from jax import lax
from jax.experimental import pallas as pl
from jax.experimental.pallas import tpu as pltpu

LANES = 128
SUBLANES = 8
_SUB_ROWS = 256          # rows per in-kernel sub-chunk (~128 KiB f32 temporaries)


def _cdiv(a, b):
    return -(-a // b)


def _sublane_unit(dtype):
    # Minimum legal second-to-last block-dim multiple for this dtype's packing.
    return SUBLANES * max(1, 4 // jnp.dtype(dtype).itemsize)


def _make_bce_kernel(*, tile_rows, sub_rows, steps, rows_total):
    """Kernel: accumulate per-element BCE of one (tile_rows, 128) block into the
    VMEM-resident output block owned by this row-split."""
    n_sub = tile_rows // sub_rows

    def kernel(pred_ref, targ_ref, out_ref):
        c = pl.program_id(0)      # row-split (parallel / core-parallel)
        i = pl.program_id(1)      # step within split (reduction, "arbitrary")

        @pl.when(i == 0)
        def _init():
            out_ref[...] = jnp.zeros_like(out_ref)

        # First global row (in the (rows, 128) view) covered by this block.
        base_row = (c * steps + i) * tile_rows
        # Hoisted out of the sub-chunk loop (JAX does not CSE broadcasts).
        row_iota = lax.broadcasted_iota(jnp.int32, (sub_rows, LANES), 0)

        def sub_loss(off):
            p = pred_ref[pl.ds(off, sub_rows), :].astype(jnp.float32)
            t = targ_ref[pl.ds(off, sub_rows), :].astype(jnp.float32)
            # torch.binary_cross_entropy clamps each log term at -100 BEFORE
            # the multiply; this clamp also guarantees padded elements
            # (p=1, t=1) contribute exactly 0 and never 0 * -inf = NaN.
            # Do NOT reorder the clamp and the multiply.
            log_p = jnp.maximum(jnp.log(p), jnp.float32(-100.0))
            log_1mp = jnp.maximum(jnp.log(1.0 - p), jnp.float32(-100.0))
            loss = -(t * log_p + (1.0 - t) * log_1mp)
            # Rows past the real array (ragged last block / extra split steps)
            # hold stale VMEM garbage -> zero them before accumulating.
            valid = (base_row + off + row_iota) < rows_total
            return jnp.where(valid, loss, jnp.float32(0.0))

        if tile_rows % SUBLANES == 0:
            if n_sub == 1:
                # (tile_rows,128) -> (8,128) via pure vreg adds (VPU only).
                out_ref[...] += sub_loss(0).reshape(-1, SUBLANES, LANES).sum(axis=0)
            else:
                def body(j, acc):
                    off = pl.multiple_of(j * sub_rows, sub_rows)
                    return acc + sub_loss(off).reshape(-1, SUBLANES, LANES).sum(axis=0)

                acc = lax.fori_loop(0, n_sub, body,
                                    jnp.zeros((SUBLANES, LANES), jnp.float32))
                out_ref[...] += acc
        else:
            # Tiny input (< 8 rows): one full-extent block, no row reduce needed.
            out_ref[...] += sub_loss(0)

    return kernel


def binary_cross_entropy_pallas(pred, target, *, tile_rows=4096, num_splits=2,
                                core_parallel=False):
    """Mean element-wise BCE; matches
    F.binary_cross_entropy(pred.squeeze(), target.squeeze().float())."""
    p = jnp.squeeze(pred)
    t = jnp.squeeze(target)
    n = p.size

    # Stream inputs in their native dtype (in-kernel f32 cast) to minimise HBM
    # bytes.  Only bool (no clean vector layout) and exotic dtypes are widened.
    if t.dtype == jnp.bool_:
        t = t.astype(jnp.uint8)                      # 1 B/elem, cheap one-time cast
    if p.dtype not in (jnp.dtype(jnp.float32), jnp.dtype(jnp.bfloat16),
                       jnp.dtype(jnp.float16)):
        p = p.astype(jnp.float32)
    if t.dtype not in (jnp.dtype(jnp.float32), jnp.dtype(jnp.bfloat16),
                       jnp.dtype(jnp.float16), jnp.dtype(jnp.int8),
                       jnp.dtype(jnp.uint8)):
        t = t.astype(jnp.float32)

    p = p.reshape(-1)
    t = t.reshape(-1)

    # Lane pad ONLY when numel is not a multiple of 128 (rare for real shapes).
    # Pad values pred=1, target=1 give exactly zero loss because the -100 clamp
    # happens before the multiply.
    # TODO(synk): stream the ragged <128-element tail through a tiny jnp
    # epilogue instead of this full-copy pad.
    rem = n % LANES
    if rem:
        p = jnp.pad(p, (0, LANES - rem), constant_values=1)
        t = jnp.pad(t, (0, LANES - rem), constant_values=1)

    rows = p.size // LANES
    P = p.reshape(rows, LANES)                       # free reshapes, no HBM copy
    T = t.reshape(rows, LANES)

    unit = max(_sublane_unit(P.dtype), _sublane_unit(T.dtype))
    if rows < unit:
        # Tiny input: single full-extent block; widen to f32 (negligible bytes).
        P = P.astype(jnp.float32)
        T = T.astype(jnp.float32)
        tile = rows
    else:
        max_tile = (rows // unit) * unit             # largest legal tile <= rows
        n_blocks = _cdiv(rows, tile_rows)
        balanced = _cdiv(_cdiv(rows, n_blocks), unit) * unit
        tile = min(max_tile, tile_rows, balanced)

    total_blocks = _cdiv(rows, tile)
    splits = max(1, min(num_splits, total_blocks))
    steps = _cdiv(total_blocks, splits)
    sub_rows = _SUB_ROWS if (tile % _SUB_ROWS == 0 and tile > _SUB_ROWS) else tile
    out_rows = SUBLANES if tile % SUBLANES == 0 else tile

    if splits * steps == total_blocks:
        idx_map = lambda c, i: (c * steps + i, 0)
    else:
        # Extra (c, i) steps past the end re-read the last block; their
        # contribution is fully zeroed by the in-kernel row mask.
        idx_map = lambda c, i: (jnp.minimum(c * steps + i, total_blocks - 1), 0)

    kernel = _make_bce_kernel(tile_rows=tile, sub_rows=sub_rows, steps=steps,
                              rows_total=rows)

    # On v7x set core_parallel=True so the split axis is sharded across both
    # TensorCores; plain "parallel" is kept as the safe default elsewhere.
    first_axis = pltpu.CORE_PARALLEL if core_parallel else "parallel"

    partial = pl.pallas_call(
        kernel,
        out_shape=jax.ShapeDtypeStruct((splits * out_rows, LANES), jnp.float32),
        grid_spec=pltpu.PrefetchScalarGridSpec(
            num_scalar_prefetch=0,
            grid=(splits, steps),
            in_specs=[
                pl.BlockSpec((tile, LANES), idx_map),
                pl.BlockSpec((tile, LANES), idx_map),
            ],
            out_specs=pl.BlockSpec((out_rows, LANES), lambda c, i: (c, 0)),
        ),
        compiler_params=pltpu.CompilerParams(
            dimension_semantics=(first_axis, "arbitrary"),
            vmem_limit_bytes=32 * 1024 * 1024,
        ),
    )(P, T)

    # Tiny final cross-lane reduce + mean division in the wrapper (f32 accum;
    # for extremely large N expect ~1e-6 relative drift vs a serial f32 sum).
    return jnp.sum(partial) / jnp.float32(n)


def _bce_reference(pred, target):
    p = jnp.squeeze(pred).astype(jnp.float32)
    t = jnp.squeeze(target).astype(jnp.float32)
    log_p = jnp.maximum(jnp.log(p), -100.0)
    log_1mp = jnp.maximum(jnp.log(1.0 - p), -100.0)
    return jnp.mean(-(t * log_p + (1.0 - t) * log_1mp))


if __name__ == "__main__":
    key = jax.random.PRNGKey(0)
    keys = jax.random.split(key, 6)

    # Primary case from the training script: NCHW probability map + binary mask.
    pred = jax.nn.sigmoid(jax.random.normal(keys[0], (2, 1, 16, 16), jnp.float32))
    target = (jax.random.uniform(keys[1], (2, 1, 16, 16)) > 0.5).astype(jnp.float32)
    loss = jax.block_until_ready(binary_cross_entropy_pallas(pred, target))
    ref = _bce_reference(pred, target)
    assert jnp.allclose(loss, ref, rtol=1e-5, atol=1e-6), (loss, ref)

    # Ragged row count (in-kernel masking) + narrow bool->uint8 target streaming.
    pred2 = jax.nn.sigmoid(jax.random.normal(keys[2], (3, 1, 64, 72), jnp.float32))
    target2 = jax.random.uniform(keys[3], (3, 1, 64, 72)) > 0.5      # bool mask
    loss2 = jax.block_until_ready(binary_cross_entropy_pallas(pred2, target2))
    ref2 = _bce_reference(pred2, target2)
    assert jnp.allclose(loss2, ref2, rtol=1e-5, atol=1e-6), (loss2, ref2)

    # numel not a multiple of 128 (lane-pad path) + soft (non-binary) targets.
    pred3 = jax.nn.sigmoid(jax.random.normal(keys[4], (2, 1, 10, 10), jnp.float32))
    target3 = jax.random.uniform(keys[5], (2, 1, 10, 10), dtype=jnp.float32)
    loss3 = jax.block_until_ready(binary_cross_entropy_pallas(pred3, target3))
    ref3 = _bce_reference(pred3, target3)
    assert jnp.allclose(loss3, ref3, rtol=1e-5, atol=1e-6), (loss3, ref3)

    print("KERNEL_OK")
</pallas_src>

<mosaic_0001>
module attributes {stable_mosaic.version = 11 : i64} {
  func.func @kernel(%arg0: i32, %arg1: i32, %arg2: memref<4x128xf32, #tpu.memory_space<vmem>>, %arg3: memref<4x128xf32, #tpu.memory_space<vmem>>, %arg4: memref<4x128xf32, #tpu.memory_space<vmem>>) attributes {dimension_semantics = [#tpu.dimension_semantics<parallel>, #tpu.dimension_semantics<arbitrary>], iteration_bounds = array<i64: 1, 1>, scalar_prefetch = 0 : i64, scratch_operands = 0 : i64, tpu.core_type = #tpu.core_type<tc>, window_params = [{transform_indices = @transform_0, window_bounds = array<i64: 4, 128>}, {transform_indices = @transform_1, window_bounds = array<i64: 4, 128>}, {transform_indices = @transform_2, window_bounds = array<i64: 4, 128>}]} {
    %c0_i32 = arith.constant 0 : i32
    %0 = arith.cmpi eq, %arg1, %c0_i32 : i32
    %1 = arith.extui %0 : i1 to i32
    %c0_i32_0 = arith.constant 0 : i32
    %2 = arith.cmpi ne, %1, %c0_i32_0 : i32
    scf.if %2 {
      %cst_15 = arith.constant 0.000000e+00 : f32
      %34 = vector.broadcast %cst_15 : f32 to vector<4x128xf32>
      %c0_16 = arith.constant 0 : index
      %c0_17 = arith.constant 0 : index
      %35 = vector.load %arg4[%c0_16, %c0_17] : memref<4x128xf32, #tpu.memory_space<vmem>>, vector<4x128xf32>
      tpu.vector_store %arg4[%c0_16, %c0_17], %34 {strides = array<i32>} : memref<4x128xf32, #tpu.memory_space<vmem>>, vector<4x128xf32>,
    } else {
    }
    %c1_i32 = arith.constant 1 : i32
    %3 = arith.muli %arg0, %c1_i32 : i32
    %4 = arith.addi %3, %arg1 : i32
    %c4_i32 = arith.constant 4 : i32
    %5 = arith.muli %4, %c4_i32 : i32
    %6 = tpu.iota {dimensions = array<i32: 0>} : vector<4x128xi32>
    %c0 = arith.constant 0 : index
    %c0_1 = arith.constant 0 : index
    %7 = vector.load %arg4[%c0, %c0_1] : memref<4x128xf32, #tpu.memory_space<vmem>>, vector<4x128xf32>
    %c0_2 = arith.constant 0 : index
    %c0_3 = arith.constant 0 : index
    %8 = vector.load %arg2[%c0_2, %c0_3] : memref<4x128xf32, #tpu.memory_space<vmem>>, vector<4x128xf32>
    %c0_4 = arith.constant 0 : index
    %c0_5 = arith.constant 0 : index
    %9 = vector.load %arg3[%c0_4, %c0_5] : memref<4x128xf32, #tpu.memory_space<vmem>>, vector<4x128xf32>
    %10 = math.log %8 : vector<4x128xf32>
    %cst = arith.constant -1.000000e+02 : f32
    %11 = vector.broadcast %cst : f32 to vector<4x128xf32>
    %12 = arith.maximumf %10, %11 : vector<4x128xf32>
    %cst_6 = arith.constant 1.000000e+00 : f32
    %13 = vector.broadcast %cst_6 : f32 to vector<4x128xf32>
    %14 = arith.subf %13, %8 : vector<4x128xf32>
    %15 = math.log %14 : vector<4x128xf32>
    %cst_7 = arith.constant -1.000000e+02 : f32
    %16 = vector.broadcast %cst_7 : f32 to vector<4x128xf32>
    %17 = arith.maximumf %15, %16 : vector<4x128xf32>
    %18 = arith.mulf %9, %12 : vector<4x128xf32>
    %cst_8 = arith.constant 1.000000e+00 : f32
    %19 = vector.broadcast %cst_8 : f32 to vector<4x128xf32>
    %20 = arith.subf %19, %9 : vector<4x128xf32>
    %21 = arith.mulf %20, %17 : vector<4x128xf32>
    %22 = arith.addf %18, %21 : vector<4x128xf32>
    %cst_9 = arith.constant 0.000000e+00 : f32
    %23 = vector.broadcast %cst_9 : f32 to vector<4x128xf32>
    %24 = arith.subf %23, %22 : vector<4x128xf32>
    %c0_i32_10 = arith.constant 0 : i32
    %25 = arith.addi %5, %c0_i32_10 : i32
    %26 = vector.broadcast %25 : i32 to vector<4x128xi32>
    %27 = arith.addi %26, %6 : vector<4x128xi32>
    %c4_i32_11 = arith.constant 4 : i32
    %28 = vector.broadcast %c4_i32_11 : i32 to vector<4x128xi32>
    %29 = arith.cmpi slt, %27, %28 : vector<4x128xi32>
    %cst_12 = arith.constant 0.000000e+00 : f32
    %30 = vector.broadcast %cst_12 : f32 to vector<4x128xf32>
    %31 = arith.select %29, %24, %30 : vector<4x128xi1>, vector<4x128xf32>
    %32 = arith.addf %7, %31 : vector<4x128xf32>
    %c0_13 = arith.constant 0 : index
    %c0_14 = arith.constant 0 : index
    %33 = vector.load %arg4[%c0_13, %c0_14] : memref<4x128xf32, #tpu.memory_space<vmem>>, vector<4x128xf32>
    tpu.vector_store %arg4[%c0_13, %c0_14], %32 {strides = array<i32>} : memref<4x128xf32, #tpu.memory_space<vmem>>, vector<4x128xf32>,
    return
  }
  func.func @transform_0(%arg0: i32, %arg1: i32) -> (i32, i32) {
    %c1_i32 = arith.constant 1 : i32
    %0 = arith.muli %arg0, %c1_i32 : i32
    %1 = arith.addi %0, %arg1 : i32
    %c0_i32 = arith.constant 0 : i32
    %c0_i32_0 = arith.constant 0 : i32
    return %1, %c0_i32 : i32, i32
  }
  func.func @transform_1(%arg0: i32, %arg1: i32) -> (i32, i32) {
    %c1_i32 = arith.constant 1 : i32
    %0 = arith.muli %arg0, %c1_i32 : i32
    %1 = arith.addi %0, %arg1 : i32
    %c0_i32 = arith.constant 0 : i32
    %c0_i32_0 = arith.constant 0 : i32
    return %1, %c0_i32 : i32, i32
  }
  func.func @transform_2(%arg0: i32, %arg1: i32) -> (i32, i32) {
    %c0_i32 = arith.constant 0 : i32
    %c0_i32_0 = arith.constant 0 : i32
    return %arg0, %c0_i32 : i32, i32
  }
}

</mosaic_0001>

<llo_original>
// kernel: tpu_custom_call.1
$region0: #{tpu_custom_call.1}
  #allocation0 [shape = 'u32[]', space=smem, size = 0x4, offset = 0x4, fixed_abs, tag = 'smem constant byte address 0x4 - core index']
  #allocation1 [shape = 'u32[144,128]{1,0:T(1,128)}', space=vmem, size = 0x12000, scoped, tag = 'internal scratch']
  %s0 = inlined_call_operand.hbm [shape: f32[4,128], index: 0, kind: input, shape index: {}]
  %s1 = inlined_call_operand.hbm [shape: f32[4,128], index: 1, kind: input, shape index: {}]
  %s2 = inlined_call_operand.hbm [shape: f32[4,128], index: 2, kind: output, shape index: {}]
  %s3 = sld [smem:[#allocation0]]
  $region30: #{tpu_custom_call.1} parent=0
    _
  %s5 = ssub.s32 1, %s3
  %s6 = scalar_select 0, %s5, %s3
  $region1: #{tpu_custom_call.1} parent=0
    #allocation2 [shape = 'u8[2048]{0}', space=vmem, size = 0x800, scoped, tag = 'input window, operand 0, single buffered']
    #allocation3 [shape = 's32[1]{0}', space=sflag, size = 0x4, scoped, tag = 'scoped memory for tpu_custom_call.1']
    #allocation4 [shape = 's32[1]{0}', space=sflag, size = 0x4, scoped, tag = 'scoped memory for tpu_custom_call.1']
    #allocation5 [shape = 'u8[2048]{0}', space=vmem, size = 0x800, scoped, tag = 'input window, operand 1, single buffered']
    #allocation6 [shape = 's32[1]{0}', space=sflag, size = 0x4, scoped, tag = 'scoped memory for tpu_custom_call.1']
    #allocation7 [shape = 'u8[2048]{0}', space=vmem, size = 0x800, scoped, tag = 'output window, operand 0, single buffered']
    %7 = vsyncpa [#allocation3], 0
    %8 = vsyncpa [#allocation6], 0
    %9 = vsyncpa [#allocation4], 0
    // Predicated region
    $region2: #{tpu_custom_call.1} parent=1 // pred_check
      _
    $region3: #{tpu_custom_call.1} parent=1 // pred_check_branch
      %11 = sbr.rel (0) target = $region5
    $region4: #{tpu_custom_call.1} parent=1 // pred_region
      %s12 = sadd.s32 0, 0
      %s14 = ssub.s32 64, 64
      %15 = vsyncadd [#allocation3], %s14
      %s16 = smul.addr %s12, 64
      %s17 = scalar_lea.hbm %s0, %s16
      %s19 = sshll.u32 [#allocation2], 4
      %s20 = int_to_ptr.vmem [resolvable:$true] %s19
      %22 = dma.hbm_to_vmem [thread:$0]  %s17, 64, %s20, [#allocation3]
    $region5: #{tpu_custom_call.1} parent=1 // pred_fallthru
      _
    // Predicated region
    $region6: #{tpu_custom_call.1} parent=1 // pred_check
      _
    $region7: #{tpu_custom_call.1} parent=1 // pred_check_branch
      %24 = sbr.rel (0) target = $region9
    $region8: #{tpu_custom_call.1} parent=1 // pred_region
      %s25 = sadd.s32 0, 0
      %s27 = ssub.s32 64, 64
      %28 = vsyncadd [#allocation6], %s27
      %s29 = smul.addr %s25, 64
      %s30 = scalar_lea.hbm %s1, %s29
      %s32 = sshll.u32 [#allocation5], 4
      %s33 = int_to_ptr.vmem [resolvable:$true] %s32
      %35 = dma.hbm_to_vmem [thread:$0]  %s30, 64, %s33, [#allocation6]
    $region9: #{tpu_custom_call.1} parent=1 // pred_fallthru
      _
    // Predicated region
    $region10: #{tpu_custom_call.1} parent=1 // pred_check
      _
    $region11: #{tpu_custom_call.1} parent=1 // pred_check_branch
      %37 = sbr.rel (0) target = $region13
    $region12: #{tpu_custom_call.1} parent=1 // pred_region
      %38 = dma.done [#allocation3], 64
    $region13: #{tpu_custom_call.1} parent=1 // pred_fallthru
      _
    // Predicated region
    $region14: #{tpu_custom_call.1} parent=1 // pred_check
      _
    $region15: #{tpu_custom_call.1} parent=1 // pred_check_branch
      %40 = sbr.rel (0) target = $region17
    $region16: #{tpu_custom_call.1} parent=1 // pred_region
      %41 = dma.done [#allocation6], 64
    $region17: #{tpu_custom_call.1} parent=1 // pred_fallthru
      _
    %s42 = sadd.s32 0, 0
    %s43 = sadd.s32 0, 0
    %p44 = scmp.eq.s32.totalorder 0, 0
    // Predicated region
    $region18: #{tpu_custom_call.1} parent=1 // pred_check
      %p45 = pneg %p44
    $region19: #{tpu_custom_call.1} parent=1 // pred_check_branch
      %47 = sbr.rel (%p45) target = $region21
    $region20: #{tpu_custom_call.1} parent=1 // pred_region
      %48 = vst [vmem:[#allocation7] sm:$0xf] 0.0
    $region21: #{tpu_custom_call.1} parent=1 // pred_fallthru
      _
    %s49 = sadd.s32 0, 0
    %s50 = smul.u32 %s49, 4
    %v51 = vlaneseq
    %v52 = vshrl.u32 %v51, 7
    %v53 = vld [vmem:[#allocation7] sm:$0xf]
    %v54 = vld [vmem:[#allocation2] sm:$0xf]
    %v55 = vld [vmem:[#allocation5] sm:$0xf]
    %v56 = vlog2.pop %v54
    %v57 = vmul.f32 %v56, 0.6931472
    %v58 = vmax.f32 %v57, -100.0
    %v59 = vsub.f32 1.0, %v54
    %v60 = vlog2.pop %v59
    %v61 = vmul.f32 %v60, 0.6931472
    %v62 = vmax.f32 %v61, -100.0
    %v63 = vmul.f32 %v55, %v58
    %v64 = vsub.f32 1.0, %v55
    %v65 = vmul.f32 %v64, %v62
    %v66 = vadd.f32 %v63, %v65
    %v67 = vsub.f32 0.0, %v66
    %v68 = vstv %s50
    %v69 = vadd.s32 %v68, %v52
    %vm70 = vcmp.lt.s32.totalorder %v69, 4
    %v71 = vsel %vm70, %v67, 0.0
    %v72 = vadd.f32 %v53, %v71
    %73 = vst [vmem:[#allocation7] sm:$0xf] %v72
    // Predicated region
    $region22: #{tpu_custom_call.1} parent=1 // pred_check
      _
    $region23: #{tpu_custom_call.1} parent=1 // pred_check_branch
      %75 = sbr.rel (0) target = $region25
    $region24: #{tpu_custom_call.1} parent=1 // pred_region
      %s77 = ssub.s32 64, 64
      %78 = vsyncadd [#allocation4], %s77
      %s80 = sshll.u32 [#allocation7], 4
      %s81 = int_to_ptr.vmem [resolvable:$true] %s80
      %83 = dma.vmem_to_hbm [thread:$0]  %s81, 64, %s2, [#allocation4]
    $region25: #{tpu_custom_call.1} parent=1 // pred_fallthru
      _
    // Predicated region
    $region26: #{tpu_custom_call.1} parent=1 // pred_check
      _
    $region27: #{tpu_custom_call.1} parent=1 // pred_check_branch
      %85 = sbr.rel (0) target = $region29
    $region28: #{tpu_custom_call.1} parent=1 // pred_region
      %86 = dma.done [#allocation4], 64
    $region29: #{tpu_custom_call.1} parent=1 // pred_fallthru
      _
    %87 = vsyncpa [#allocation3], 1
    %88 = vsyncpa [#allocation6], 1
    %89 = vsyncpa [#allocation4], 1

</llo_original>
